<compile_context>
chip_gen: v5e
topology: v5e:2x2
jax: 0.10.0
libtpu: 0.0.40
codegen_flags: <defaults>
</compile_context>

<pallas_src>
import jax
import jax.numpy as jnp
import numpy as np
from jax import lax
from jax.experimental import pallas as pl
from jax.experimental.pallas import tpu as pltpu


def _round_up(x, m):
    return ((x + m - 1) // m) * m


def _postprocess_pose_kernel(x_ref, y_ref, out_ref):
    """One row-tile: per-row argmax + max-softmax-prob for the x and y heads."""

    def row_stats(logits):
        logits = logits.astype(jnp.float32)                       # (TM, K)
        K = logits.shape[-1]
        m = jnp.max(logits, axis=-1, keepdims=True)               # (TM, 1)
        s = jnp.sum(jnp.exp(logits - m), axis=-1, keepdims=True)  # (TM, 1)
        prob_max = pl.reciprocal(s, approx=False)                 # max softmax value
        k = lax.broadcasted_iota(jnp.int32, logits.shape, 1)      # (TM, K)
        # first index attaining the max (matches jnp/torch argmax for distinct maxima)
        idx = jnp.min(jnp.where(logits == m, k, K), axis=-1, keepdims=True)
        return idx.astype(jnp.float32), prob_max

    px, vx = row_stats(x_ref[...])
    py, vy = row_stats(y_ref[...])
    out_ref[...] = jnp.concatenate([px, py, jnp.minimum(vx, vy)], axis=-1)  # (TM, 3)


def post_process_pose_dr(x_coord, y_coord, *, tile_rows=8192):
    """Pallas implementation of PostProcessPoseDR.forward on outputs['x_coord'/'y_coord'].

    x_coord: (..., W) logits over x bins, y_coord: (..., H) logits over y bins.
    Returns (..., 3) float32: [pred_x_bin, pred_y_bin, min(max_prob_x, max_prob_y)].
    """
    lead = x_coord.shape[:-1]
    assert y_coord.shape[:-1] == lead, "x_coord / y_coord leading dims must match"
    W = x_coord.shape[-1]
    H = y_coord.shape[-1]
    R = int(np.prod(lead)) if lead else 1

    x2 = jnp.reshape(x_coord, (R, W))
    y2 = jnp.reshape(y_coord, (R, H))

    # Row tile: as large as possible subject to
    #   (a) the user cap,
    #   (b) a VMEM budget (~6 MiB per block set => ~12 MiB double-buffered, under the
    #       16 MiB v5e scoped default),
    #   (c) >= 2 grid steps when R allows it (v7x megacore split),
    # and always a multiple of 8 (sublane granularity).  No padding: ragged last tile.
    bytes_per_row = W * x2.dtype.itemsize + H * y2.dtype.itemsize + 3 * 4
    budget_rows = max(8, ((6 * 1024 * 1024) // bytes_per_row) // 8 * 8)
    half_rows = _round_up(pl.cdiv(R, 2), 8)
    tm = max(8, min(_round_up(tile_rows, 8), budget_rows, half_rows))

    grid = (pl.cdiv(R, tm),)

    out = pl.pallas_call(
        _postprocess_pose_kernel,
        out_shape=jax.ShapeDtypeStruct((R, 3), jnp.float32),
        grid=grid,
        in_specs=[
            pl.BlockSpec((tm, W), lambda i: (i, 0)),
            pl.BlockSpec((tm, H), lambda i: (i, 0)),
        ],
        out_specs=pl.BlockSpec((tm, 3), lambda i: (i, 0)),
        compiler_params=pltpu.CompilerParams(dimension_semantics=("parallel",)),
    )(x2, y2)

    return jnp.reshape(out, lead + (3,))


def _reference(x_coord, y_coord):
    """Pure-JAX mirror of the PyTorch forward."""
    prob_x = jax.nn.softmax(x_coord.astype(jnp.float32), axis=-1)
    prob_y = jax.nn.softmax(y_coord.astype(jnp.float32), axis=-1)
    max_val_x = jnp.max(prob_x, axis=-1)
    max_val_y = jnp.max(prob_y, axis=-1)
    preds_x = jnp.argmax(prob_x, axis=-1).astype(jnp.float32)
    preds_y = jnp.argmax(prob_y, axis=-1).astype(jnp.float32)
    score = jnp.where(max_val_x > max_val_y, max_val_y, max_val_x)
    return jnp.stack([preds_x, preds_y, score], axis=-1)


if __name__ == "__main__":
    # Small but representative: (batch, num_queries, num_joints, num_bins); J=17 makes
    # R=136 non-divisible by the tile (exercises the ragged last block) and the
    # ceil(R/2) clamp keeps a 2-step "parallel" grid.
    B, Q, J, W, H = 2, 4, 17, 48, 32
    key = jax.random.PRNGKey(0)
    kx, ky = jax.random.split(key, 2)

    x_coord = jax.random.normal(kx, (B, Q, J, W), dtype=jnp.float32)
    y_coord = jax.random.normal(ky, (B, Q, J, H), dtype=jnp.float32)

    out = post_process_pose_dr(x_coord, y_coord)
    out = jax.block_until_ready(out)

    ref = jax.block_until_ready(_reference(x_coord, y_coord))
    np.testing.assert_allclose(np.asarray(out), np.asarray(ref), rtol=1e-5, atol=1e-6)
    assert out.shape == (B, Q, J, 3)

    print("KERNEL_OK")
</pallas_src>

<mosaic_0001>
module attributes {stable_mosaic.version = 11 : i64} {
  func.func @_postprocess_pose_kernel(%arg0: i32, %arg1: memref<72x48xf32, #tpu.memory_space<vmem>>, %arg2: memref<72x32xf32, #tpu.memory_space<vmem>>, %arg3: memref<72x3xf32, #tpu.memory_space<vmem>>) attributes {dimension_semantics = [#tpu.dimension_semantics<parallel>], iteration_bounds = array<i64: 2>, scalar_prefetch = 0 : i64, scratch_operands = 0 : i64, tpu.core_type = #tpu.core_type<tc>, window_params = [{transform_indices = @transform_0, window_bounds = array<i64: 72, 48>}, {transform_indices = @transform_1, window_bounds = array<i64: 72, 32>}, {transform_indices = @transform_2, window_bounds = array<i64: 72, 3>}]} {
    %c0 = arith.constant 0 : index
    %c0_0 = arith.constant 0 : index
    %0 = vector.load %arg1[%c0, %c0_0] : memref<72x48xf32, #tpu.memory_space<vmem>>, vector<72x48xf32>
    %cst = arith.constant dense<0xFF800000> : vector<72xf32>
    %1 = vector.multi_reduction <maximumf>, %0, %cst [1] : vector<72x48xf32> to vector<72xf32>
    %2 = vector.shape_cast %1 : vector<72xf32> to vector<72x1xf32>
    %3 = vector.broadcast %2 : vector<72x1xf32> to vector<72x48xf32>
    %4 = arith.subf %0, %3 : vector<72x48xf32>
    %5 = math.exp %4 : vector<72x48xf32>
    %cst_1 = arith.constant dense<0.000000e+00> : vector<72xf32>
    %6 = vector.multi_reduction <add>, %5, %cst_1 [1] : vector<72x48xf32> to vector<72xf32>
    %7 = vector.shape_cast %6 : vector<72xf32> to vector<72x1xf32>
    %8 = tpu.reciprocal %7 : vector<72x1xf32> -> vector<72x1xf32>
    %9 = tpu.iota {dimensions = array<i32: 1>} : vector<72x48xi32>
    %10 = vector.broadcast %2 : vector<72x1xf32> to vector<72x48xf32>
    %11 = arith.cmpf oeq, %0, %10 : vector<72x48xf32>
    %c48_i32 = arith.constant 48 : i32
    %12 = vector.broadcast %c48_i32 : i32 to vector<72x48xi32>
    %13 = arith.select %11, %9, %12 : vector<72x48xi1>, vector<72x48xi32>
    %cst_2 = arith.constant dense<2147483647> : vector<72xi32>
    %14 = vector.multi_reduction <minsi>, %13, %cst_2 [1] : vector<72x48xi32> to vector<72xi32>
    %15 = vector.shape_cast %14 : vector<72xi32> to vector<72x1xi32>
    %16 = arith.sitofp %15 : vector<72x1xi32> to vector<72x1xf32>
    %c0_3 = arith.constant 0 : index
    %c0_4 = arith.constant 0 : index
    %17 = vector.load %arg2[%c0_3, %c0_4] : memref<72x32xf32, #tpu.memory_space<vmem>>, vector<72x32xf32>
    %cst_5 = arith.constant dense<0xFF800000> : vector<72xf32>
    %18 = vector.multi_reduction <maximumf>, %17, %cst_5 [1] : vector<72x32xf32> to vector<72xf32>
    %19 = vector.shape_cast %18 : vector<72xf32> to vector<72x1xf32>
    %20 = vector.broadcast %19 : vector<72x1xf32> to vector<72x32xf32>
    %21 = arith.subf %17, %20 : vector<72x32xf32>
    %22 = math.exp %21 : vector<72x32xf32>
    %cst_6 = arith.constant dense<0.000000e+00> : vector<72xf32>
    %23 = vector.multi_reduction <add>, %22, %cst_6 [1] : vector<72x32xf32> to vector<72xf32>
    %24 = vector.shape_cast %23 : vector<72xf32> to vector<72x1xf32>
    %25 = tpu.reciprocal %24 : vector<72x1xf32> -> vector<72x1xf32>
    %26 = tpu.iota {dimensions = array<i32: 1>} : vector<72x32xi32>
    %27 = vector.broadcast %19 : vector<72x1xf32> to vector<72x32xf32>
    %28 = arith.cmpf oeq, %17, %27 : vector<72x32xf32>
    %c32_i32 = arith.constant 32 : i32
    %29 = vector.broadcast %c32_i32 : i32 to vector<72x32xi32>
    %30 = arith.select %28, %26, %29 : vector<72x32xi1>, vector<72x32xi32>
    %cst_7 = arith.constant dense<2147483647> : vector<72xi32>
    %31 = vector.multi_reduction <minsi>, %30, %cst_7 [1] : vector<72x32xi32> to vector<72xi32>
    %32 = vector.shape_cast %31 : vector<72xi32> to vector<72x1xi32>
    %33 = arith.sitofp %32 : vector<72x1xi32> to vector<72x1xf32>
    %34 = arith.minimumf %8, %25 : vector<72x1xf32>
    %35 = tpu.concatenate %16, %33, %34 in 1 : vector<72x1xf32>, vector<72x1xf32>, vector<72x1xf32> -> vector<72x3xf32>
    %c0_8 = arith.constant 0 : index
    %c0_9 = arith.constant 0 : index
    %36 = vector.load %arg3[%c0_8, %c0_9] : memref<72x3xf32, #tpu.memory_space<vmem>>, vector<72x3xf32>
    tpu.vector_store %arg3[%c0_8, %c0_9], %35 {strides = array<i32>} : memref<72x3xf32, #tpu.memory_space<vmem>>, vector<72x3xf32>,
    return
  }
  func.func @transform_0(%arg0: i32) -> (i32, i32) {
    %c0_i32 = arith.constant 0 : i32
    %c0_i32_0 = arith.constant 0 : i32
    return %arg0, %c0_i32 : i32, i32
  }
  func.func @transform_1(%arg0: i32) -> (i32, i32) {
    %c0_i32 = arith.constant 0 : i32
    %c0_i32_0 = arith.constant 0 : i32
    return %arg0, %c0_i32 : i32, i32
  }
  func.func @transform_2(%arg0: i32) -> (i32, i32) {
    %c0_i32 = arith.constant 0 : i32
    %c0_i32_0 = arith.constant 0 : i32
    return %arg0, %c0_i32 : i32, i32
  }
}

</mosaic_0001>

<llo_original>
// kernel: tpu_custom_call.1
$region0: #{tpu_custom_call.1}
  #allocation0 [shape = 'u32[]', space=smem, size = 0x4, offset = 0x4, fixed_abs, tag = 'smem constant byte address 0x4 - core index']
  #allocation1 [shape = 'u32[72,128]{1,0:T(1,128)}', space=vmem, size = 0x9000, scoped, tag = 'internal scratch']
  %s0 = inlined_call_operand.vmem [shape: f32[136,48], index: 0, kind: input, shape index: {}]
  %s1 = inlined_call_operand.vmem [shape: f32[136,32], index: 1, kind: input, shape index: {}]
  %s2 = inlined_call_operand.vmem [shape: f32[136,3], index: 2, kind: output, shape index: {}]
  %s3 = sld [smem:[#allocation0]]
  $region89: #{tpu_custom_call.1} parent=0
    _
  %s5 = ssub.s32 1, %s3
  %s6 = scalar_select 0, %s5, %s3
  $region1: #{tpu_custom_call.1} parent=0
    #allocation2 [shape = 'u8[73728]{0}', space=vmem, size = 0x12000, scoped, tag = 'output window, operand 0']
    loop: start=0, step=1, limit=4
    $region2: #{tpu_custom_call.1} parent=1 // loop_pre_header
      _
    $region3: #{tpu_custom_call.1} parent=1 // loop_header
      %s8 = sphi 0, %s12
      %p9 = scmp.ge.s32.totalorder %s8, 4
      %s18 = sphi 0, %s20
      %s21 = sphi 0, %s18
      %s22 = sphi 0, %s21
      %s38 = sphi 0, %s22
      %s44 = sphi 0, %s46
      %s47 = sphi 0, %s44
      %s48 = sphi 0, %s47
      %s64 = sphi 0, %s48
      %s70 = sphi 0, %s72
      %s73 = sphi 0, %s70
      %s74 = sphi 0, %s73
      %s90 = sphi 0, %s74
    $region4: #{tpu_custom_call.1} parent=1 // loop_header_branch
      %11 = sbr.rel (%p9) target = $region8
    $region5: #{tpu_custom_call.1} parent=1 // loop_body
      %s13 = ssub.s32 %s8, 1
      %s14 = ssub.s32 %s8, 2
      %s15 = sadd.s32 %s8, 1
      %s16 = ssub.s32 %s8, %s15
      %p17 = scmp.eq.s32.totalorder %s16, 0
      %s19 = sadd.s32 %s18, 1
      %s20 = scalar_select %p17, %s18, %s19
      %p23 = pneg %p17
      %p24 = scmp.eq.s32.totalorder %s8, 1
      %p25 = por %p23, %p24
      %p26 = scmp.ne.s32.totalorder %s18, %s21
      %p27 = scmp.eq.s32.totalorder %s8, 0
      %p28 = por %p26, %p27
      %p29 = scmp.ne.s32.totalorder %s18, %s21
      %p30 = scmp.eq.s32.totalorder %s13, 1
      %p31 = por %p29, %p30
      %p32 = scmp.ne.s32.totalorder %s21, %s22
      %p33 = scmp.eq.s32.totalorder %s13, 0
      %p34 = por %p32, %p33
      %p35 = scmp.ne.s32.totalorder %s21, %s22
      %p36 = scmp.eq.s32.totalorder %s14, 1
      %p37 = por %p35, %p36
      %p39 = scmp.ne.s32.totalorder %s22, %s38
      %p40 = scmp.eq.s32.totalorder %s14, 0
      %p41 = por %p39, %p40
      %s42 = ssub.s32 %s8, %s15
      %p43 = scmp.eq.s32.totalorder %s42, 0
      %s45 = sadd.s32 %s44, 1
      %s46 = scalar_select %p43, %s44, %s45
      %p49 = pneg %p43
      %p50 = scmp.eq.s32.totalorder %s8, 1
      %p51 = por %p49, %p50
      %p52 = scmp.ne.s32.totalorder %s44, %s47
      %p53 = scmp.eq.s32.totalorder %s8, 0
      %p54 = por %p52, %p53
      %p55 = scmp.ne.s32.totalorder %s44, %s47
      %p56 = scmp.eq.s32.totalorder %s13, 1
      %p57 = por %p55, %p56
      %p58 = scmp.ne.s32.totalorder %s47, %s48
      %p59 = scmp.eq.s32.totalorder %s13, 0
      %p60 = por %p58, %p59
      %p61 = scmp.ne.s32.totalorder %s47, %s48
      %p62 = scmp.eq.s32.totalorder %s14, 1
      %p63 = por %p61, %p62
      %p65 = scmp.ne.s32.totalorder %s48, %s64
      %p66 = scmp.eq.s32.totalorder %s14, 0
      %p67 = por %p65, %p66
      %s68 = ssub.s32 %s8, %s15
      %p69 = scmp.eq.s32.totalorder %s68, 0
      %s71 = sadd.s32 %s70, 1
      %s72 = scalar_select %p69, %s70, %s71
      %p75 = pneg %p69
      %p76 = scmp.eq.s32.totalorder %s8, 1
      %p77 = por %p75, %p76
      %p78 = scmp.ne.s32.totalorder %s70, %s73
      %p79 = scmp.eq.s32.totalorder %s8, 0
      %p80 = por %p78, %p79
      %p81 = scmp.ne.s32.totalorder %s70, %s73
      %p82 = scmp.eq.s32.totalorder %s13, 1
      %p83 = por %p81, %p82
      %p84 = scmp.ne.s32.totalorder %s73, %s74
      %p85 = scmp.eq.s32.totalorder %s13, 0
      %p86 = por %p84, %p85
      %p87 = scmp.ne.s32.totalorder %s73, %s74
      %p88 = scmp.eq.s32.totalorder %s14, 1
      %p89 = por %p87, %p88
      %p91 = scmp.ne.s32.totalorder %s74, %s90
      %p92 = scmp.eq.s32.totalorder %s14, 0
      %p93 = por %p91, %p92
      %p94 = scmp.le.s32.totalorder 1, %s8
      %p95 = scmp.lt.s32.totalorder %s8, 3
      %p96 = pnand %p94, %p95
      %p97 = pneg %p96
      // Predicated region
      $region9: #{tpu_custom_call.1} parent=5 // pred_check
        _
      $region10: #{tpu_custom_call.1} parent=5 // pred_check_branch
        %99 = sbr.rel (%p96) target = $region12
      $region11: #{tpu_custom_call.1} parent=5 // pred_region
        %s100 = ssub.s32 %s8, 1
      $region12: #{tpu_custom_call.1} parent=5 // pred_fallthru
        _
      %p101 = scmp.lt.s32.totalorder %s8, 2
      // Predicated region
      $region13: #{tpu_custom_call.1} parent=5 // pred_check
        %p102 = pneg %p101
      $region14: #{tpu_custom_call.1} parent=5 // pred_check_branch
        %104 = sbr.rel (%p102) target = $region16
      $region15: #{tpu_custom_call.1} parent=5 // pred_region
        // Predicated region
        $region17: #{tpu_custom_call.1} parent=15 // pred_check
          %p105 = pneg %p28
        $region18: #{tpu_custom_call.1} parent=15 // pred_check_branch
          %107 = sbr.rel (%p105) target = $region20
        $region19: #{tpu_custom_call.1} parent=15 // pred_region
          %s108 = smul.u32 9, %s8
          %s109 = ssub.s32 17, %s108
          %p110 = scmp.lt.s32.totalorder %s109, 9
          %s111 = scalar_select %p110, %s109, 9
          %s112 = smul.u32 8, %s111
          %p113 = scmp.lt.s32.totalorder %s108, 16
          %s114 = scalar_select %p113, %s108, 16
          %s115 = smul.addr %s114, 8
          %s116 = scalar_lea.vmem %s0, %s115
          %s117 = smul.u32 9, %s8
          %s118 = ssub.s32 17, %s117
          %p119 = scmp.lt.s32.totalorder %s118, 9
          %s120 = scalar_select %p119, %s118, 9
          %s121 = smul.u32 8, %s120
        $region20: #{tpu_custom_call.1} parent=15 // pred_fallthru
          _
        // Predicated region
        $region21: #{tpu_custom_call.1} parent=15 // pred_check
          %p122 = pneg %p54
        $region22: #{tpu_custom_call.1} parent=15 // pred_check_branch
          %124 = sbr.rel (%p122) target = $region24
        $region23: #{tpu_custom_call.1} parent=15 // pred_region
          %s125 = smul.u32 9, %s8
          %s126 = ssub.s32 17, %s125
          %p127 = scmp.lt.s32.totalorder %s126, 9
          %s128 = scalar_select %p127, %s126, 9
          %s129 = smul.u32 8, %s128
          %p130 = scmp.lt.s32.totalorder %s125, 16
          %s131 = scalar_select %p130, %s125, 16
          %s132 = smul.addr %s131, 8
          %s133 = scalar_lea.vmem %s1, %s132
          %s134 = smul.u32 9, %s8
          %s135 = ssub.s32 17, %s134
          %p136 = scmp.lt.s32.totalorder %s135, 9
          %s137 = scalar_select %p136, %s135, 9
          %s138 = smul.u32 8, %s137
        $region24: #{tpu_custom_call.1} parent=15 // pred_fallthru
          _
      $region16: #{tpu_custom_call.1} parent=5 // pred_fallthru
        _
      %p139 = scmp.le.s32.totalorder 1, %s8
      %p140 = scmp.lt.s32.totalorder %s8, 3
      %p141 = pnand %p139, %p140
      %p142 = pneg %p141
      // Predicated region
      $region25: #{tpu_custom_call.1} parent=5 // pred_check
        _
      $region26: #{tpu_custom_call.1} parent=5 // pred_check_branch
        %144 = sbr.rel (%p141) target = $region28
      $region27: #{tpu_custom_call.1} parent=5 // pred_region
        %s145 = ssub.s32 %s8, 1
        %s146 = smul.u32 9, %s13
        %s147 = ssub.s32 17, %s146
        %p148 = scmp.lt.s32.totalorder %s147, 9
        %s149 = scalar_select %p148, %s147, 9
        %s150 = smul.u32 8, %s149
        %p151 = scmp.lt.s32.totalorder %s146, 16
        %s152 = scalar_select %p151, %s146, 16
        %s153 = smul.addr %s152, 8
        %s154 = scalar_lea.vmem %s0, %s153
        %p155 = pneg %p34
        %p156 = pneg %p31
        %s157 = smul.u32 9, %s13
        %s158 = ssub.s32 17, %s157
        %p159 = scmp.lt.s32.totalorder %s158, 9
        %s160 = scalar_select %p159, %s158, 9
        %s161 = smul.u32 8, %s160
        %p162 = scmp.lt.s32.totalorder %s157, 16
        %s163 = scalar_select %p162, %s157, 16
        %s164 = smul.addr %s163, 8
        %s165 = scalar_lea.vmem %s1, %s164
        %p166 = pneg %p60
        %p167 = pneg %p57
        %p168 = pneg %p86
        %p169 = pneg %p83
        %s170 = sand.u32 %s73, 1
        %s171 = sand.u32 %s73, 1
        %s172 = smul.addr %s171, 72
        %s173 = scalar_lea.vmem [#allocation2], %s172
        %s174 = smul.u32 9, %s13
        %s175 = ssub.s32 17, %s174
        %p176 = scmp.lt.s32.totalorder %s175, 9
        %s177 = scalar_select %p176, %s175, 9
        %s178 = smul.u32 8, %s177
        %p179 = scmp.lt.s32.totalorder %s174, 16
        %s180 = scalar_select %p179, %s174, 16
        %s181 = smul.addr %s180, 8
        %s182 = scalar_lea.vmem %s0, %s181
        %s183 = smul.u32 9, %s13
        %s184 = ssub.s32 17, %s183
        %p185 = scmp.lt.s32.totalorder %s184, 9
        %s186 = scalar_select %p185, %s184, 9
        %s187 = smul.u32 8, %s186
        %s188 = smul.u32 9, %s13
        %s189 = ssub.s32 17, %s188
        %p190 = scmp.lt.s32.totalorder %s189, 9
        %s191 = scalar_select %p190, %s189, 9
        %s192 = smul.u32 8, %s191
        %p193 = scmp.lt.s32.totalorder %s188, 16
        %s194 = scalar_select %p193, %s188, 16
        %s195 = smul.addr %s194, 8
        %s196 = scalar_lea.vmem %s1, %s195
        %s197 = smul.u32 9, %s13
        %s198 = ssub.s32 17, %s197
        %p199 = scmp.lt.s32.totalorder %s198, 9
        %s200 = scalar_select %p199, %s198, 9
        %s201 = smul.u32 8, %s200
        %s202 = smul.u32 9, %s13
        %s203 = ssub.s32 17, %s202
        %p204 = scmp.lt.s32.totalorder %s203, 9
        %s205 = scalar_select %p204, %s203, 9
        %s206 = smul.u32 8, %s205
        %v207 = vld [vmem:[%s182] sm:$0xff]
        %v208 = vld [vmem:[%s182 + $0x8] sm:$0xff]
        %v209 = vld [vmem:[%s182 + $0x10] sm:$0xff]
        %v210 = vld [vmem:[%s182 + $0x18] sm:$0xff]
        %v211 = vld [vmem:[%s182 + $0x20] sm:$0xff]
        %v212 = vld [vmem:[%s182 + $0x28] sm:$0xff]
        %v213 = vld [vmem:[%s182 + $0x30] sm:$0xff]
        %v214 = vld [vmem:[%s182 + $0x38] sm:$0xff]
        %v215 = vld [vmem:[%s182 + $0x40] sm:$0xff]
        %vm216 = vcmask 392192
        %v217 = vsel %vm216, %v207, -inf
        %218 = vmax.xlane.f32.xlu0 %v217
        %v219 = vpop.xlane.xlu0 %218
        %v220 = vsel %vm216, %v208, -inf
        %221 = vmax.xlane.f32.xlu0 %v220
        %v222 = vpop.xlane.xlu0 %221
        %v223 = vsel %vm216, %v209, -inf
        %224 = vmax.xlane.f32.xlu0 %v223
        %v225 = vpop.xlane.xlu0 %224
        %v226 = vsel %vm216, %v210, -inf
        %227 = vmax.xlane.f32.xlu0 %v226
        %v228 = vpop.xlane.xlu0 %227
        %v229 = vsel %vm216, %v211, -inf
        %230 = vmax.xlane.f32.xlu0 %v229
        %v231 = vpop.xlane.xlu0 %230
        %v232 = vsel %vm216, %v212, -inf
        %233 = vmax.xlane.f32.xlu0 %v232
        %v234 = vpop.xlane.xlu0 %233
        %v235 = vsel %vm216, %v213, -inf
        %236 = vmax.xlane.f32.xlu0 %v235
        %v237 = vpop.xlane.xlu0 %236
        %v238 = vsel %vm216, %v214, -inf
        %239 = vmax.xlane.f32.xlu0 %v238
        %v240 = vpop.xlane.xlu0 %239
        %v241 = vsel %vm216, %v215, -inf
        %242 = vmax.xlane.f32.xlu0 %v241
        %v243 = vpop.xlane.xlu0 %242
        %v244 = vsub.f32 %v207, %v219
        %v245 = vsub.f32 %v208, %v222
        %v246 = vsub.f32 %v209, %v225
        %v247 = vsub.f32 %v210, %v228
        %v248 = vsub.f32 %v211, %v231
        %v249 = vsub.f32 %v212, %v234
        %v250 = vsub.f32 %v213, %v237
        %v251 = vsub.f32 %v214, %v240
        %v252 = vsub.f32 %v215, %v243
        %v253 = vmul.f32 %v244, 1.442695
        %v254 = vpow.pop %v253
        %v255 = vmul.f32 %v245, 1.442695
        %v256 = vpow.pop %v255
        %v257 = vmul.f32 %v246, 1.442695
        %v258 = vpow.pop %v257
        %v259 = vmul.f32 %v247, 1.442695
        %v260 = vpow.pop %v259
        %v261 = vmul.f32 %v248, 1.442695
        %v262 = vpow.pop %v261
        %v263 = vmul.f32 %v249, 1.442695
        %v264 = vpow.pop %v263
        %v265 = vmul.f32 %v250, 1.442695
        %v266 = vpow.pop %v265
        %v267 = vmul.f32 %v251, 1.442695
        %v268 = vpow.pop %v267
        %v269 = vmul.f32 %v252, 1.442695
        %v270 = vpow.pop %v269
        %v271 = vsel %vm216, %v254, 0.0
        %272 = vadd.xlane.f32.xlu0 %v271
        %v273 = vpop.xlane.xlu0 %272
        %v274 = vsel %vm216, %v256, 0.0
        %275 = vadd.xlane.f32.xlu0 %v274
        %v276 = vpop.xlane.xlu0 %275
        %v277 = vsel %vm216, %v258, 0.0
        %278 = vadd.xlane.f32.xlu0 %v277
        %v279 = vpop.xlane.xlu0 %278
        %v280 = vsel %vm216, %v260, 0.0
        %281 = vadd.xlane.f32.xlu0 %v280
        %v282 = vpop.xlane.xlu0 %281
        %v283 = vsel %vm216, %v262, 0.0
        %284 = vadd.xlane.f32.xlu0 %v283
        %v285 = vpop.xlane.xlu0 %284
        %v286 = vsel %vm216, %v264, 0.0
        %287 = vadd.xlane.f32.xlu0 %v286
        %v288 = vpop.xlane.xlu0 %287
        %v289 = vsel %vm216, %v266, 0.0
        %290 = vadd.xlane.f32.xlu0 %v289
        %v291 = vpop.xlane.xlu0 %290
        %v292 = vsel %vm216, %v268, 0.0
        %293 = vadd.xlane.f32.xlu0 %v292
        %v294 = vpop.xlane.xlu0 %293
        %v295 = vsel %vm216, %v270, 0.0
        %296 = vadd.xlane.f32.xlu0 %v295
        %v297 = vpop.xlane.xlu0 %296
        %v298 = vrcp.pop %v273
        %v299 = vmul.f32 %v273, %v298
        %v300 = vsub.f32 1.0, %v299
        %v301 = vmul.f32 %v298, %v300
        %v302 = vadd.f32 %v298, %v301
        %vm303 = vweird.f32 %v273
        %vm304 = vweird.f32 %v298
        %vm305 = vmor %vm303, %vm304
        %v306 = vsel %vm305, %v298, %v302
        %v307 = vand.u32 2147483647, %v273
        %vm308 = vcmp.eq.f32.partialorder %v307, 8.507059e+37
        %v309 = vand.u32 %v273, 2147483648
        %v310 = vor.u32 1.1754944e-38, %v309
        %v311 = vsel %vm308, %v310, %v306
        %v312 = vrcp.pop %v276
        %v313 = vmul.f32 %v276, %v312
        %v314 = vsub.f32 1.0, %v313
        %v315 = vmul.f32 %v312, %v314
        %v316 = vadd.f32 %v312, %v315
        %vm317 = vweird.f32 %v276
        %vm318 = vweird.f32 %v312
        %vm319 = vmor %vm317, %vm318
        %v320 = vsel %vm319, %v312, %v316
        %v321 = vand.u32 2147483647, %v276
        %vm322 = vcmp.eq.f32.partialorder %v321, 8.507059e+37
        %v323 = vand.u32 %v276, 2147483648
        %v324 = vor.u32 1.1754944e-38, %v323
        %v325 = vsel %vm322, %v324, %v320
        %v326 = vrcp.pop %v279
        %v327 = vmul.f32 %v279, %v326
        %v328 = vsub.f32 1.0, %v327
        %v329 = vmul.f32 %v326, %v328
        %v330 = vadd.f32 %v326, %v329
        %vm331 = vweird.f32 %v279
        %vm332 = vweird.f32 %v326
        %vm333 = vmor %vm331, %vm332
        %v334 = vsel %vm333, %v326, %v330
        %v335 = vand.u32 2147483647, %v279
        %vm336 = vcmp.eq.f32.partialorder %v335, 8.507059e+37
        %v337 = vand.u32 %v279, 2147483648
        %v338 = vor.u32 1.1754944e-38, %v337
        %v339 = vsel %vm336, %v338, %v334
        %v340 = vrcp.pop %v282
        %v341 = vmul.f32 %v282, %v340
        %v342 = vsub.f32 1.0, %v341
        %v343 = vmul.f32 %v340, %v342
        %v344 = vadd.f32 %v340, %v343
        %vm345 = vweird.f32 %v282
        %vm346 = vweird.f32 %v340
        %vm347 = vmor %vm345, %vm346
        %v348 = vsel %vm347, %v340, %v344
        %v349 = vand.u32 2147483647, %v282
        %vm350 = vcmp.eq.f32.partialorder %v349, 8.507059e+37
        %v351 = vand.u32 %v282, 2147483648
        %v352 = vor.u32 1.1754944e-38, %v351
        %v353 = vsel %vm350, %v352, %v348
        %v354 = vrcp.pop %v285
        %v355 = vmul.f32 %v285, %v354
        %v356 = vsub.f32 1.0, %v355
        %v357 = vmul.f32 %v354, %v356
        %v358 = vadd.f32 %v354, %v357
        %vm359 = vweird.f32 %v285
        %vm360 = vweird.f32 %v354
        %vm361 = vmor %vm359, %vm360
        %v362 = vsel %vm361, %v354, %v358
        %v363 = vand.u32 2147483647, %v285
        %vm364 = vcmp.eq.f32.partialorder %v363, 8.507059e+37
        %v365 = vand.u32 %v285, 2147483648
        %v366 = vor.u32 1.1754944e-38, %v365
        %v367 = vsel %vm364, %v366, %v362
        %v368 = vrcp.pop %v288
        %v369 = vmul.f32 %v288, %v368
        %v370 = vsub.f32 1.0, %v369
        %v371 = vmul.f32 %v368, %v370
        %v372 = vadd.f32 %v368, %v371
        %vm373 = vweird.f32 %v288
        %vm374 = vweird.f32 %v368
        %vm375 = vmor %vm373, %vm374
        %v376 = vsel %vm375, %v368, %v372
        %v377 = vand.u32 2147483647, %v288
        %vm378 = vcmp.eq.f32.partialorder %v377, 8.507059e+37
        %v379 = vand.u32 %v288, 2147483648
        %v380 = vor.u32 1.1754944e-38, %v379
        %v381 = vsel %vm378, %v380, %v376
        %v382 = vrcp.pop %v291
        %v383 = vmul.f32 %v291, %v382
        %v384 = vsub.f32 1.0, %v383
        %v385 = vmul.f32 %v382, %v384
        %v386 = vadd.f32 %v382, %v385
        %vm387 = vweird.f32 %v291
        %vm388 = vweird.f32 %v382
        %vm389 = vmor %vm387, %vm388
        %v390 = vsel %vm389, %v382, %v386
        %v391 = vand.u32 2147483647, %v291
        %vm392 = vcmp.eq.f32.partialorder %v391, 8.507059e+37
        %v393 = vand.u32 %v291, 2147483648
        %v394 = vor.u32 1.1754944e-38, %v393
        %v395 = vsel %vm392, %v394, %v390
        %v396 = vrcp.pop %v294
        %v397 = vmul.f32 %v294, %v396
        %v398 = vsub.f32 1.0, %v397
        %v399 = vmul.f32 %v396, %v398
        %v400 = vadd.f32 %v396, %v399
        %vm401 = vweird.f32 %v294
        %vm402 = vweird.f32 %v396
        %vm403 = vmor %vm401, %vm402
        %v404 = vsel %vm403, %v396, %v400
        %v405 = vand.u32 2147483647, %v294
        %vm406 = vcmp.eq.f32.partialorder %v405, 8.507059e+37
        %v407 = vand.u32 %v294, 2147483648
        %v408 = vor.u32 1.1754944e-38, %v407
        %v409 = vsel %vm406, %v408, %v404
        %v410 = vrcp.pop %v297
        %v411 = vmul.f32 %v297, %v410
        %v412 = vsub.f32 1.0, %v411
        %v413 = vmul.f32 %v410, %v412
        %v414 = vadd.f32 %v410, %v413
        %vm415 = vweird.f32 %v297
        %vm416 = vweird.f32 %v410
        %vm417 = vmor %vm415, %vm416
        %v418 = vsel %vm417, %v410, %v414
        %v419 = vand.u32 2147483647, %v297
        %vm420 = vcmp.eq.f32.partialorder %v419, 8.507059e+37
        %v421 = vand.u32 %v297, 2147483648
        %v422 = vor.u32 1.1754944e-38, %v421
        %v423 = vsel %vm420, %v422, %v418
        %v424 = vlaneseq
        %v425 = vand.u32 %v424, 127
        %vm426 = vcmp.eq.f32.partialorder %v207, %v219
        %vm427 = vcmp.eq.f32.partialorder %v208, %v222
        %vm428 = vcmp.eq.f32.partialorder %v209, %v225
        %vm429 = vcmp.eq.f32.partialorder %v210, %v228
        %vm430 = vcmp.eq.f32.partialorder %v211, %v231
        %vm431 = vcmp.eq.f32.partialorder %v212, %v234
        %vm432 = vcmp.eq.f32.partialorder %v213, %v237
        %vm433 = vcmp.eq.f32.partialorder %v214, %v240
        %vm434 = vcmp.eq.f32.partialorder %v215, %v243
        %v435 = vsel %vm426, %v425, 48
        %v436 = vsel %vm427, %v425, 48
        %v437 = vsel %vm428, %v425, 48
        %v438 = vsel %vm429, %v425, 48
        %v439 = vsel %vm430, %v425, 48
        %v440 = vsel %vm431, %v425, 48
        %v441 = vsel %vm432, %v425, 48
        %v442 = vsel %vm433, %v425, 48
        %v443 = vsel %vm434, %v425, 48
        %v444 = vsel %vm216, %v435, 2147483647
        %v445 = vand.u32 %v444, 65535
        %v446 = vshra.s32 %v444, 16
        %v447 = vcvt.s32.f32 %v445
        %v448 = vcvt.s32.f32 %v446
        %449 = vmin.xlane.f32.xlu0 %v448
        %v450 = vpop.xlane.xlu0 %449
        %vm451 = vcmp.eq.f32.partialorder %v448, %v450
        %v452 = vsel %vm451, %v447, inf
        %453 = vmin.xlane.f32.xlu0 %v452
        %v454 = vpop.xlane.xlu0 %453
        %v455 = vcvt.f32.s32 %v454
        %v456 = vcvt.f32.s32 %v450
        %v457 = vshll.u32 %v456, 16
        %v458 = vadd.s32 %v457, %v455
        %v459 = vsel %vm216, %v436, 2147483647
        %v460 = vand.u32 %v459, 65535
        %v461 = vshra.s32 %v459, 16
        %v462 = vcvt.s32.f32 %v460
        %v463 = vcvt.s32.f32 %v461
        %464 = vmin.xlane.f32.xlu0 %v463
        %v465 = vpop.xlane.xlu0 %464
        %vm466 = vcmp.eq.f32.partialorder %v463, %v465
        %v467 = vsel %vm466, %v462, inf
        %468 = vmin.xlane.f32.xlu0 %v467
        %v469 = vpop.xlane.xlu0 %468
        %v470 = vcvt.f32.s32 %v469
        %v471 = vcvt.f32.s32 %v465
        %v472 = vshll.u32 %v471, 16
        %v473 = vadd.s32 %v472, %v470
        %v474 = vsel %vm216, %v437, 2147483647
        %v475 = vand.u32 %v474, 65535
        %v476 = vshra.s32 %v474, 16
        %v477 = vcvt.s32.f32 %v475
        %v478 = vcvt.s32.f32 %v476
        %479 = vmin.xlane.f32.xlu0 %v478
        %v480 = vpop.xlane.xlu0 %479
        %vm481 = vcmp.eq.f32.partialorder %v478, %v480
        %v482 = vsel %vm481, %v477, inf
        %483 = vmin.xlane.f32.xlu0 %v482
        %v484 = vpop.xlane.xlu0 %483
        %v485 = vcvt.f32.s32 %v484
        %v486 = vcvt.f32.s32 %v480
        %v487 = vshll.u32 %v486, 16
        %v488 = vadd.s32 %v487, %v485
        %v489 = vsel %vm216, %v438, 2147483647
        %v490 = vand.u32 %v489, 65535
        %v491 = vshra.s32 %v489, 16
        %v492 = vcvt.s32.f32 %v490
        %v493 = vcvt.s32.f32 %v491
        %494 = vmin.xlane.f32.xlu0 %v493
        %v495 = vpop.xlane.xlu0 %494
        %vm496 = vcmp.eq.f32.partialorder %v493, %v495
        %v497 = vsel %vm496, %v492, inf
        %498 = vmin.xlane.f32.xlu0 %v497
        %v499 = vpop.xlane.xlu0 %498
        %v500 = vcvt.f32.s32 %v499
        %v501 = vcvt.f32.s32 %v495
        %v502 = vshll.u32 %v501, 16
        %v503 = vadd.s32 %v502, %v500
        %v504 = vsel %vm216, %v439, 2147483647
        %v505 = vand.u32 %v504, 65535
        %v506 = vshra.s32 %v504, 16
        %v507 = vcvt.s32.f32 %v505
        %v508 = vcvt.s32.f32 %v506
        %509 = vmin.xlane.f32.xlu0 %v508
        %v510 = vpop.xlane.xlu0 %509
        %vm511 = vcmp.eq.f32.partialorder %v508, %v510
        %v512 = vsel %vm511, %v507, inf
        %513 = vmin.xlane.f32.xlu0 %v512
        %v514 = vpop.xlane.xlu0 %513
        %v515 = vcvt.f32.s32 %v514
        %v516 = vcvt.f32.s32 %v510
        %v517 = vshll.u32 %v516, 16
        %v518 = vadd.s32 %v517, %v515
        %v519 = vsel %vm216, %v440, 2147483647
        %v520 = vand.u32 %v519, 65535
        %v521 = vshra.s32 %v519, 16
        %v522 = vcvt.s32.f32 %v520
        %v523 = vcvt.s32.f32 %v521
        %524 = vmin.xlane.f32.xlu0 %v523
        %v525 = vpop.xlane.xlu0 %524
        %vm526 = vcmp.eq.f32.partialorder %v523, %v525
        %v527 = vsel %vm526, %v522, inf
        %528 = vmin.xlane.f32.xlu0 %v527
        %v529 = vpop.xlane.xlu0 %528
        %v530 = vcvt.f32.s32 %v529
        %v531 = vcvt.f32.s32 %v525
        %v532 = vshll.u32 %v531, 16
        %v533 = vadd.s32 %v532, %v530
        %v534 = vsel %vm216, %v441, 2147483647
        %v535 = vand.u32 %v534, 65535
        %v536 = vshra.s32 %v534, 16
        %v537 = vcvt.s32.f32 %v535
        %v538 = vcvt.s32.f32 %v536
        %539 = vmin.xlane.f32.xlu0 %v538
        %v540 = vpop.xlane.xlu0 %539
        %vm541 = vcmp.eq.f32.partialorder %v538, %v540
        %v542 = vsel %vm541, %v537, inf
        %543 = vmin.xlane.f32.xlu0 %v542
        %v544 = vpop.xlane.xlu0 %543
        %v545 = vcvt.f32.s32 %v544
        %v546 = vcvt.f32.s32 %v540
        %v547 = vshll.u32 %v546, 16
        %v548 = vadd.s32 %v547, %v545
        %v549 = vsel %vm216, %v442, 2147483647
        %v550 = vand.u32 %v549, 65535
        %v551 = vshra.s32 %v549, 16
        %v552 = vcvt.s32.f32 %v550
        %v553 = vcvt.s32.f32 %v551
        %554 = vmin.xlane.f32.xlu0 %v553
        %v555 = vpop.xlane.xlu0 %554
        %vm556 = vcmp.eq.f32.partialorder %v553, %v555
        %v557 = vsel %vm556, %v552, inf
        %558 = vmin.xlane.f32.xlu0 %v557
        %v559 = vpop.xlane.xlu0 %558
        %v560 = vcvt.f32.s32 %v559
        %v561 = vcvt.f32.s32 %v555
        %v562 = vshll.u32 %v561, 16
        %v563 = vadd.s32 %v562, %v560
        %v564 = vsel %vm216, %v443, 2147483647
        %v565 = vand.u32 %v564, 65535
        %v566 = vshra.s32 %v564, 16
        %v567 = vcvt.s32.f32 %v565
        %v568 = vcvt.s32.f32 %v566
        %569 = vmin.xlane.f32.xlu0 %v568
        %v570 = vpop.xlane.xlu0 %569
        %vm571 = vcmp.eq.f32.partialorder %v568, %v570
        %v572 = vsel %vm571, %v567, inf
        %573 = vmin.xlane.f32.xlu0 %v572
        %v574 = vpop.xlane.xlu0 %573
        %v575 = vcvt.f32.s32 %v574
        %v576 = vcvt.f32.s32 %v570
        %v577 = vshll.u32 %v576, 16
        %v578 = vadd.s32 %v577, %v575
        %v579 = vcvt.s32.f32 %v458
        %v580 = vcvt.s32.f32 %v473
        %v581 = vcvt.s32.f32 %v488
        %v582 = vcvt.s32.f32 %v503
        %v583 = vcvt.s32.f32 %v518
        %v584 = vcvt.s32.f32 %v533
        %v585 = vcvt.s32.f32 %v548
        %v586 = vcvt.s32.f32 %v563
        %v587 = vcvt.s32.f32 %v578
        %v588 = vld [vmem:[%s196] sm:$0xff]
        %v589 = vld [vmem:[%s196 + $0x8] sm:$0xff]
        %v590 = vld [vmem:[%s196 + $0x10] sm:$0xff]
        %v591 = vld [vmem:[%s196 + $0x18] sm:$0xff]
        %v592 = vld [vmem:[%s196 + $0x20] sm:$0xff]
        %v593 = vld [vmem:[%s196 + $0x28] sm:$0xff]
        %v594 = vld [vmem:[%s196 + $0x30] sm:$0xff]
        %v595 = vld [vmem:[%s196 + $0x38] sm:$0xff]
        %v596 = vld [vmem:[%s196 + $0x40] sm:$0xff]
        %vm597 = vcmask 261120
        %v598 = vsel %vm597, %v588, -inf
        %599 = vmax.xlane.f32.xlu0 %v598
        %v600 = vpop.xlane.xlu0 %599
        %v601 = vsel %vm597, %v589, -inf
        %602 = vmax.xlane.f32.xlu0 %v601
        %v603 = vpop.xlane.xlu0 %602
        %v604 = vsel %vm597, %v590, -inf
        %605 = vmax.xlane.f32.xlu0 %v604
        %v606 = vpop.xlane.xlu0 %605
        %v607 = vsel %vm597, %v591, -inf
        %608 = vmax.xlane.f32.xlu0 %v607
        %v609 = vpop.xlane.xlu0 %608
        %v610 = vsel %vm597, %v592, -inf
        %611 = vmax.xlane.f32.xlu0 %v610
        %v612 = vpop.xlane.xlu0 %611
        %v613 = vsel %vm597, %v593, -inf
        %614 = vmax.xlane.f32.xlu0 %v613
        %v615 = vpop.xlane.xlu0 %614
        %v616 = vsel %vm597, %v594, -inf
        %617 = vmax.xlane.f32.xlu0 %v616
        %v618 = vpop.xlane.xlu0 %617
        %v619 = vsel %vm597, %v595, -inf
        %620 = vmax.xlane.f32.xlu0 %v619
        %v621 = vpop.xlane.xlu0 %620
        %v622 = vsel %vm597, %v596, -inf
        %623 = vmax.xlane.f32.xlu0 %v622
        %v624 = vpop.xlane.xlu0 %623
        %v625 = vsub.f32 %v588, %v600
        %v626 = vsub.f32 %v589, %v603
        %v627 = vsub.f32 %v590, %v606
        %v628 = vsub.f32 %v591, %v609
        %v629 = vsub.f32 %v592, %v612
        %v630 = vsub.f32 %v593, %v615
        %v631 = vsub.f32 %v594, %v618
        %v632 = vsub.f32 %v595, %v621
        %v633 = vsub.f32 %v596, %v624
        %v634 = vmul.f32 %v625, 1.442695
        %v635 = vpow.pop %v634
        %v636 = vmul.f32 %v626, 1.442695
        %v637 = vpow.pop %v636
        %v638 = vmul.f32 %v627, 1.442695
        %v639 = vpow.pop %v638
        %v640 = vmul.f32 %v628, 1.442695
        %v641 = vpow.pop %v640
        %v642 = vmul.f32 %v629, 1.442695
        %v643 = vpow.pop %v642
        %v644 = vmul.f32 %v630, 1.442695
        %v645 = vpow.pop %v644
        %v646 = vmul.f32 %v631, 1.442695
        %v647 = vpow.pop %v646
        %v648 = vmul.f32 %v632, 1.442695
        %v649 = vpow.pop %v648
        %v650 = vmul.f32 %v633, 1.442695
        %v651 = vpow.pop %v650
        %v652 = vsel %vm597, %v635, 0.0
        %653 = vadd.xlane.f32.xlu0 %v652
        %v654 = vpop.xlane.xlu0 %653
        %v655 = vsel %vm597, %v637, 0.0
        %656 = vadd.xlane.f32.xlu0 %v655
        %v657 = vpop.xlane.xlu0 %656
        %v658 = vsel %vm597, %v639, 0.0
        %659 = vadd.xlane.f32.xlu0 %v658
        %v660 = vpop.xlane.xlu0 %659
        %v661 = vsel %vm597, %v641, 0.0
        %662 = vadd.xlane.f32.xlu0 %v661
        %v663 = vpop.xlane.xlu0 %662
        %v664 = vsel %vm597, %v643, 0.0
        %665 = vadd.xlane.f32.xlu0 %v664
        %v666 = vpop.xlane.xlu0 %665
        %v667 = vsel %vm597, %v645, 0.0
        %668 = vadd.xlane.f32.xlu0 %v667
        %v669 = vpop.xlane.xlu0 %668
        %v670 = vsel %vm597, %v647, 0.0
        %671 = vadd.xlane.f32.xlu0 %v670
        %v672 = vpop.xlane.xlu0 %671
        %v673 = vsel %vm597, %v649, 0.0
        %674 = vadd.xlane.f32.xlu0 %v673
        %v675 = vpop.xlane.xlu0 %674
        %v676 = vsel %vm597, %v651, 0.0
        %677 = vadd.xlane.f32.xlu0 %v676
        %v678 = vpop.xlane.xlu0 %677
        %v679 = vrcp.pop %v654
        %v680 = vmul.f32 %v654, %v679
        %v681 = vsub.f32 1.0, %v680
        %v682 = vmul.f32 %v679, %v681
        %v683 = vadd.f32 %v679, %v682
        %vm684 = vweird.f32 %v654
        %vm685 = vweird.f32 %v679
        %vm686 = vmor %vm684, %vm685
        %v687 = vsel %vm686, %v679, %v683
        %v688 = vand.u32 2147483647, %v654
        %vm689 = vcmp.eq.f32.partialorder %v688, 8.507059e+37
        %v690 = vand.u32 %v654, 2147483648
        %v691 = vor.u32 1.1754944e-38, %v690
        %v692 = vsel %vm689, %v691, %v687
        %v693 = vrcp.pop %v657
        %v694 = vmul.f32 %v657, %v693
        %v695 = vsub.f32 1.0, %v694
        %v696 = vmul.f32 %v693, %v695
        %v697 = vadd.f32 %v693, %v696
        %vm698 = vweird.f32 %v657
        %vm699 = vweird.f32 %v693
        %vm700 = vmor %vm698, %vm699
        %v701 = vsel %vm700, %v693, %v697
        %v702 = vand.u32 2147483647, %v657
        %vm703 = vcmp.eq.f32.partialorder %v702, 8.507059e+37
        %v704 = vand.u32 %v657, 2147483648
        %v705 = vor.u32 1.1754944e-38, %v704
        %v706 = vsel %vm703, %v705, %v701
        %v707 = vrcp.pop %v660
        %v708 = vmul.f32 %v660, %v707
        %v709 = vsub.f32 1.0, %v708
        %v710 = vmul.f32 %v707, %v709
        %v711 = vadd.f32 %v707, %v710
        %vm712 = vweird.f32 %v660
        %vm713 = vweird.f32 %v707
        %vm714 = vmor %vm712, %vm713
        %v715 = vsel %vm714, %v707, %v711
        %v716 = vand.u32 2147483647, %v660
        %vm717 = vcmp.eq.f32.partialorder %v716, 8.507059e+37
        %v718 = vand.u32 %v660, 2147483648
        %v719 = vor.u32 1.1754944e-38, %v718
        %v720 = vsel %vm717, %v719, %v715
        %v721 = vrcp.pop %v663
        %v722 = vmul.f32 %v663, %v721
        %v723 = vsub.f32 1.0, %v722
        %v724 = vmul.f32 %v721, %v723
        %v725 = vadd.f32 %v721, %v724
        %vm726 = vweird.f32 %v663
        %vm727 = vweird.f32 %v721
        %vm728 = vmor %vm726, %vm727
        %v729 = vsel %vm728, %v721, %v725
        %v730 = vand.u32 2147483647, %v663
        %vm731 = vcmp.eq.f32.partialorder %v730, 8.507059e+37
        %v732 = vand.u32 %v663, 2147483648
        %v733 = vor.u32 1.1754944e-38, %v732
        %v734 = vsel %vm731, %v733, %v729
        %v735 = vrcp.pop %v666
        %v736 = vmul.f32 %v666, %v735
        %v737 = vsub.f32 1.0, %v736
        %v738 = vmul.f32 %v735, %v737
        %v739 = vadd.f32 %v735, %v738
        %vm740 = vweird.f32 %v666
        %vm741 = vweird.f32 %v735
        %vm742 = vmor %vm740, %vm741
        %v743 = vsel %vm742, %v735, %v739
        %v744 = vand.u32 2147483647, %v666
        %vm745 = vcmp.eq.f32.partialorder %v744, 8.507059e+37
        %v746 = vand.u32 %v666, 2147483648
        %v747 = vor.u32 1.1754944e-38, %v746
        %v748 = vsel %vm745, %v747, %v743
        %v749 = vrcp.pop %v669
        %v750 = vmul.f32 %v669, %v749
        %v751 = vsub.f32 1.0, %v750
        %v752 = vmul.f32 %v749, %v751
        %v753 = vadd.f32 %v749, %v752
        %vm754 = vweird.f32 %v669
        %vm755 = vweird.f32 %v749
        %vm756 = vmor %vm754, %vm755
        %v757 = vsel %vm756, %v749, %v753
        %v758 = vand.u32 2147483647, %v669
        %vm759 = vcmp.eq.f32.partialorder %v758, 8.507059e+37
        %v760 = vand.u32 %v669, 2147483648
        %v761 = vor.u32 1.1754944e-38, %v760
        %v762 = vsel %vm759, %v761, %v757
        %v763 = vrcp.pop %v672
        %v764 = vmul.f32 %v672, %v763
        %v765 = vsub.f32 1.0, %v764
        %v766 = vmul.f32 %v763, %v765
        %v767 = vadd.f32 %v763, %v766
        %vm768 = vweird.f32 %v672
        %vm769 = vweird.f32 %v763
        %vm770 = vmor %vm768, %vm769
        %v771 = vsel %vm770, %v763, %v767
        %v772 = vand.u32 2147483647, %v672
        %vm773 = vcmp.eq.f32.partialorder %v772, 8.507059e+37
        %v774 = vand.u32 %v672, 2147483648
        %v775 = vor.u32 1.1754944e-38, %v774
        %v776 = vsel %vm773, %v775, %v771
        %v777 = vrcp.pop %v675
        %v778 = vmul.f32 %v675, %v777
        %v779 = vsub.f32 1.0, %v778
        %v780 = vmul.f32 %v777, %v779
        %v781 = vadd.f32 %v777, %v780
        %vm782 = vweird.f32 %v675
        %vm783 = vweird.f32 %v777
        %vm784 = vmor %vm782, %vm783
        %v785 = vsel %vm784, %v777, %v781
        %v786 = vand.u32 2147483647, %v675
        %vm787 = vcmp.eq.f32.partialorder %v786, 8.507059e+37
        %v788 = vand.u32 %v675, 2147483648
        %v789 = vor.u32 1.1754944e-38, %v788
        %v790 = vsel %vm787, %v789, %v785
        %v791 = vrcp.pop %v678
        %v792 = vmul.f32 %v678, %v791
        %v793 = vsub.f32 1.0, %v792
        %v794 = vmul.f32 %v791, %v793
        %v795 = vadd.f32 %v791, %v794
        %vm796 = vweird.f32 %v678
        %vm797 = vweird.f32 %v791
        %vm798 = vmor %vm796, %vm797
        %v799 = vsel %vm798, %v791, %v795
        %v800 = vand.u32 2147483647, %v678
        %vm801 = vcmp.eq.f32.partialorder %v800, 8.507059e+37
        %v802 = vand.u32 %v678, 2147483648
        %v803 = vor.u32 1.1754944e-38, %v802
        %v804 = vsel %vm801, %v803, %v799
        %vm805 = vcmp.eq.f32.partialorder %v588, %v600
        %vm806 = vcmp.eq.f32.partialorder %v589, %v603
        %vm807 = vcmp.eq.f32.partialorder %v590, %v606
        %vm808 = vcmp.eq.f32.partialorder %v591, %v609
        %vm809 = vcmp.eq.f32.partialorder %v592, %v612
        %vm810 = vcmp.eq.f32.partialorder %v593, %v615
        %vm811 = vcmp.eq.f32.partialorder %v594, %v618
        %vm812 = vcmp.eq.f32.partialorder %v595, %v621
        %vm813 = vcmp.eq.f32.partialorder %v596, %v624
        %v814 = vsel %vm805, %v425, 32
        %v815 = vsel %vm806, %v425, 32
        %v816 = vsel %vm807, %v425, 32
        %v817 = vsel %vm808, %v425, 32
        %v818 = vsel %vm809, %v425, 32
        %v819 = vsel %vm810, %v425, 32
        %v820 = vsel %vm811, %v425, 32
        %v821 = vsel %vm812, %v425, 32
        %v822 = vsel %vm813, %v425, 32
        %v823 = vsel %vm597, %v814, 2147483647
        %v824 = vand.u32 %v823, 65535
        %v825 = vshra.s32 %v823, 16
        %v826 = vcvt.s32.f32 %v824
        %v827 = vcvt.s32.f32 %v825
        %828 = vmin.xlane.f32.xlu0 %v827
        %v829 = vpop.xlane.xlu0 %828
        %vm830 = vcmp.eq.f32.partialorder %v827, %v829
        %v831 = vsel %vm830, %v826, inf
        %832 = vmin.xlane.f32.xlu0 %v831
        %v833 = vpop.xlane.xlu0 %832
        %v834 = vcvt.f32.s32 %v833
        %v835 = vcvt.f32.s32 %v829
        %v836 = vshll.u32 %v835, 16
        %v837 = vadd.s32 %v836, %v834
        %v838 = vsel %vm597, %v815, 2147483647
        %v839 = vand.u32 %v838, 65535
        %v840 = vshra.s32 %v838, 16
        %v841 = vcvt.s32.f32 %v839
        %v842 = vcvt.s32.f32 %v840
        %843 = vmin.xlane.f32.xlu0 %v842
        %v844 = vpop.xlane.xlu0 %843
        %vm845 = vcmp.eq.f32.partialorder %v842, %v844
        %v846 = vsel %vm845, %v841, inf
        %847 = vmin.xlane.f32.xlu0 %v846
        %v848 = vpop.xlane.xlu0 %847
        %v849 = vcvt.f32.s32 %v848
        %v850 = vcvt.f32.s32 %v844
        %v851 = vshll.u32 %v850, 16
        %v852 = vadd.s32 %v851, %v849
        %v853 = vsel %vm597, %v816, 2147483647
        %v854 = vand.u32 %v853, 65535
        %v855 = vshra.s32 %v853, 16
        %v856 = vcvt.s32.f32 %v854
        %v857 = vcvt.s32.f32 %v855
        %858 = vmin.xlane.f32.xlu0 %v857
        %v859 = vpop.xlane.xlu0 %858
        %vm860 = vcmp.eq.f32.partialorder %v857, %v859
        %v861 = vsel %vm860, %v856, inf
        %862 = vmin.xlane.f32.xlu0 %v861
        %v863 = vpop.xlane.xlu0 %862
        %v864 = vcvt.f32.s32 %v863
        %v865 = vcvt.f32.s32 %v859
        %v866 = vshll.u32 %v865, 16
        %v867 = vadd.s32 %v866, %v864
        %v868 = vsel %vm597, %v817, 2147483647
        %v869 = vand.u32 %v868, 65535
        %v870 = vshra.s32 %v868, 16
        %v871 = vcvt.s32.f32 %v869
        %v872 = vcvt.s32.f32 %v870
        %873 = vmin.xlane.f32.xlu0 %v872
        %v874 = vpop.xlane.xlu0 %873
        %vm875 = vcmp.eq.f32.partialorder %v872, %v874
        %v876 = vsel %vm875, %v871, inf
        %877 = vmin.xlane.f32.xlu0 %v876
        %v878 = vpop.xlane.xlu0 %877
        %v879 = vcvt.f32.s32 %v878
        %v880 = vcvt.f32.s32 %v874
        %v881 = vshll.u32 %v880, 16
        %v882 = vadd.s32 %v881, %v879
        %v883 = vsel %vm597, %v818, 2147483647
        %v884 = vand.u32 %v883, 65535
        %v885 = vshra.s32 %v883, 16
        %v886 = vcvt.s32.f32 %v884
        %v887 = vcvt.s32.f32 %v885
        %888 = vmin.xlane.f32.xlu0 %v887
        %v889 = vpop.xlane.xlu0 %888
        %vm890 = vcmp.eq.f32.partialorder %v887, %v889
        %v891 = vsel %vm890, %v886, inf
        %892 = vmin.xlane.f32.xlu0 %v891
        %v893 = vpop.xlane.xlu0 %892
        %v894 = vcvt.f32.s32 %v893
        %v895 = vcvt.f32.s32 %v889
        %v896 = vshll.u32 %v895, 16
        %v897 = vadd.s32 %v896, %v894
        %v898 = vsel %vm597, %v819, 2147483647
        %v899 = vand.u32 %v898, 65535
        %v900 = vshra.s32 %v898, 16
        %v901 = vcvt.s32.f32 %v899
        %v902 = vcvt.s32.f32 %v900
        %903 = vmin.xlane.f32.xlu0 %v902
        %v904 = vpop.xlane.xlu0 %903
        %vm905 = vcmp.eq.f32.partialorder %v902, %v904
        %v906 = vsel %vm905, %v901, inf
        %907 = vmin.xlane.f32.xlu0 %v906
        %v908 = vpop.xlane.xlu0 %907
        %v909 = vcvt.f32.s32 %v908
        %v910 = vcvt.f32.s32 %v904
        %v911 = vshll.u32 %v910, 16
        %v912 = vadd.s32 %v911, %v909
        %v913 = vsel %vm597, %v820, 2147483647
        %v914 = vand.u32 %v913, 65535
        %v915 = vshra.s32 %v913, 16
        %v916 = vcvt.s32.f32 %v914
        %v917 = vcvt.s32.f32 %v915
        %918 = vmin.xlane.f32.xlu0 %v917
        %v919 = vpop.xlane.xlu0 %918
        %vm920 = vcmp.eq.f32.partialorder %v917, %v919
        %v921 = vsel %vm920, %v916, inf
        %922 = vmin.xlane.f32.xlu0 %v921
        %v923 = vpop.xlane.xlu0 %922
        %v924 = vcvt.f32.s32 %v923
        %v925 = vcvt.f32.s32 %v919
        %v926 = vshll.u32 %v925, 16
        %v927 = vadd.s32 %v926, %v924
        %v928 = vsel %vm597, %v821, 2147483647
        %v929 = vand.u32 %v928, 65535
        %v930 = vshra.s32 %v928, 16
        %v931 = vcvt.s32.f32 %v929
        %v932 = vcvt.s32.f32 %v930
        %933 = vmin.xlane.f32.xlu0 %v932
        %v934 = vpop.xlane.xlu0 %933
        %vm935 = vcmp.eq.f32.partialorder %v932, %v934
        %v936 = vsel %vm935, %v931, inf
        %937 = vmin.xlane.f32.xlu0 %v936
        %v938 = vpop.xlane.xlu0 %937
        %v939 = vcvt.f32.s32 %v938
        %v940 = vcvt.f32.s32 %v934
        %v941 = vshll.u32 %v940, 16
        %v942 = vadd.s32 %v941, %v939
        %v943 = vsel %vm597, %v822, 2147483647
        %v944 = vand.u32 %v943, 65535
        %v945 = vshra.s32 %v943, 16
        %v946 = vcvt.s32.f32 %v944
        %v947 = vcvt.s32.f32 %v945
        %948 = vmin.xlane.f32.xlu0 %v947
        %v949 = vpop.xlane.xlu0 %948
        %vm950 = vcmp.eq.f32.partialorder %v947, %v949
        %v951 = vsel %vm950, %v946, inf
        %952 = vmin.xlane.f32.xlu0 %v951
        %v953 = vpop.xlane.xlu0 %952
        %v954 = vcvt.f32.s32 %v953
        %v955 = vcvt.f32.s32 %v949
        %v956 = vshll.u32 %v955, 16
        %v957 = vadd.s32 %v956, %v954
        %v958 = vcvt.s32.f32 %v837
        %v959 = vcvt.s32.f32 %v852
        %v960 = vcvt.s32.f32 %v867
        %v961 = vcvt.s32.f32 %v882
        %v962 = vcvt.s32.f32 %v897
        %v963 = vcvt.s32.f32 %v912
        %v964 = vcvt.s32.f32 %v927
        %v965 = vcvt.s32.f32 %v942
        %v966 = vcvt.s32.f32 %v957
        %v967 = vmin.f32 %v311, %v692
        %v968 = vmin.f32 %v325, %v706
        %v969 = vmin.f32 %v339, %v720
        %v970 = vmin.f32 %v353, %v734
        %v971 = vmin.f32 %v367, %v748
        %v972 = vmin.f32 %v381, %v762
        %v973 = vmin.f32 %v395, %v776
        %v974 = vmin.f32 %v409, %v790
        %v975 = vmin.f32 %v423, %v804
        %vm976 = vcmask 7168
        %v977 = vsel %vm976, %v579, %v958
        %v978 = vsel %vm976, %v580, %v959
        %v979 = vsel %vm976, %v581, %v960
        %v980 = vsel %vm976, %v582, %v961
        %v981 = vsel %vm976, %v583, %v962
        %v982 = vsel %vm976, %v584, %v963
        %v983 = vsel %vm976, %v585, %v964
        %v984 = vsel %vm976, %v586, %v965
        %v985 = vsel %vm976, %v587, %v966
        %vm986 = vcmask 15360
        %v987 = vsel %vm986, %v977, %v967
        %v988 = vsel %vm986, %v978, %v968
        %v989 = vsel %vm986, %v979, %v969
        %v990 = vsel %vm986, %v980, %v970
        %v991 = vsel %vm986, %v981, %v971
        %v992 = vsel %vm986, %v982, %v972
        %v993 = vsel %vm986, %v983, %v973
        %v994 = vsel %vm986, %v984, %v974
        %v995 = vsel %vm986, %v985, %v975
        %vm996 = vcmask 23552
        %997 = vst.msk [vmem:[%s173] sm:$0xff] %vm996, %v987
        %998 = vst.msk [vmem:[%s173 + $0x8] sm:$0xff] %vm996, %v988
        %999 = vst.msk [vmem:[%s173 + $0x10] sm:$0xff] %vm996, %v989
        %1000 = vst.msk [vmem:[%s173 + $0x18] sm:$0xff] %vm996, %v990
        %1001 = vst.msk [vmem:[%s173 + $0x20] sm:$0xff] %vm996, %v991
        %1002 = vst.msk [vmem:[%s173 + $0x28] sm:$0xff] %vm996, %v992
        %1003 = vst.msk [vmem:[%s173 + $0x30] sm:$0xff] %vm996, %v993
        %1004 = vst.msk [vmem:[%s173 + $0x38] sm:$0xff] %vm996, %v994
        %1005 = vst.msk [vmem:[%s173 + $0x40] sm:$0xff] %vm996, %v995
        %s1006 = sand.u32 %s73, 1
        %s1007 = sand.u32 %s73, 1
        %s1008 = smul.addr %s1007, 72
        %s1009 = scalar_lea.vmem [#allocation2], %s1008
        // Predicated region
        $region29: #{tpu_custom_call.1} parent=27 // pred_check
          %p1010 = pneg %p83
        $region30: #{tpu_custom_call.1} parent=27 // pred_check_branch
          %1012 = sbr.rel (%p1010) target = $region32
        $region31: #{tpu_custom_call.1} parent=27 // pred_region
          %s1013 = smul.u32 9, %s13
          %s1014 = ssub.s32 17, %s1013
          %p1015 = scmp.lt.s32.totalorder %s1014, 9
          %s1016 = scalar_select %p1015, %s1014, 9
          %s1017 = smul.u32 8, %s1016
          %p1018 = scmp.ne.s32.totalorder 0, %s1017
          %s1019 = smul.addr %s1013, 8
          %s1020 = scalar_lea.vmem %s2, %s1019
          // Predicated region
          $region33: #{tpu_custom_call.1} parent=31 // pred_check
            %p1021 = pneg %p1018
          $region34: #{tpu_custom_call.1} parent=31 // pred_check_branch
            %1023 = sbr.rel (%p1021) target = $region36
          $region35: #{tpu_custom_call.1} parent=31 // pred_region
            // Predicated region
            $region37: #{tpu_custom_call.1} parent=35 // pred_check
              _
            $region38: #{tpu_custom_call.1} parent=35 // pred_check_branch
              %1025 = sbr.rel (0) target = $region40
            $region39: #{tpu_custom_call.1} parent=35 // pred_region
              // Predicated region
              $region59: #{tpu_custom_call.1} parent=39 // pred_check
                _
              $region60: #{tpu_custom_call.1} parent=39 // pred_check_branch
                %1092 = sbr.rel (0) target = $region62
              $region61: #{tpu_custom_call.1} parent=39 // pred_region
                %s1093 = sdiv.u32.pop %s1016, 9
                %s1094 = srem.u32.pop %s1016, 9
                // While loop
                $region63: #{tpu_custom_call.1} parent=61 // loop_pre_header
                  _
                $region64: #{tpu_custom_call.1} parent=61 // loop_header
                  %s1096 = sphi 0, %s1098
                  %p1097 = scmp.ge.s32.totalorder %s1096, %s1093
                  %s1101 = sphi 0, %s1124
                  %s1102 = sphi %s1009, %s1127
                  %s1103 = sphi %s1020, %s1128
                $region65: #{tpu_custom_call.1} parent=61 // loop_header_branch
                  %1100 = sbr.rel (%p1097) target = $region69
                $region66: #{tpu_custom_call.1} parent=61 // loop_body
                  %v1104 = vld [vmem:[%s1102] sm:$0xff]
                  %1105 = vst [vmem:[%s1103] sm:$0xff] %v1104
                  %v1106 = vld [vmem:[%s1102 + $0x8] sm:$0xff]
                  %1107 = vst [vmem:[%s1103 + $0x8] sm:$0xff] %v1106
                  %v1108 = vld [vmem:[%s1102 + $0x10] sm:$0xff]
                  %1109 = vst [vmem:[%s1103 + $0x10] sm:$0xff] %v1108
                  %v1110 = vld [vmem:[%s1102 + $0x18] sm:$0xff]
                  %1111 = vst [vmem:[%s1103 + $0x18] sm:$0xff] %v1110
                  %v1112 = vld [vmem:[%s1102 + $0x20] sm:$0xff]
                  %1113 = vst [vmem:[%s1103 + $0x20] sm:$0xff] %v1112
                  %v1114 = vld [vmem:[%s1102 + $0x28] sm:$0xff]
                  %1115 = vst [vmem:[%s1103 + $0x28] sm:$0xff] %v1114
                  %v1116 = vld [vmem:[%s1102 + $0x30] sm:$0xff]
                  %1117 = vst [vmem:[%s1103 + $0x30] sm:$0xff] %v1116
                  %v1118 = vld [vmem:[%s1102 + $0x38] sm:$0xff]
                  %1119 = vst [vmem:[%s1103 + $0x38] sm:$0xff] %v1118
                  %v1120 = vld [vmem:[%s1102 + $0x40] sm:$0xff]
                  %1121 = vst [vmem:[%s1103 + $0x40] sm:$0xff] %v1120
                  %s1122 = sadd.s32 1, %s1101
                  %p1123 = scmp.ge.s32.totalorder %s1122, %s1093
                  %s1124 = scalar_select %p1123, 0, %s1122
                  %s1125 = smul.u32 %s1124, 72
                  %s1126 = smul.u32 %s1124, 72
                  %s1127 = scalar_lea.vmem %s1009, %s1125 [#allocation2]
                  %s1128 = scalar_lea.vmem %s1020, %s1126
                $region67: #{tpu_custom_call.1} parent=61 // loop_footer
                  %s1098 = sadd.s32 %s1096, 1
                $region68: #{tpu_custom_call.1} parent=61 // loop_footer_branch
                  %1095 = sbr.rel target = $region64
                $region69: #{tpu_custom_call.1} parent=61 // loop_exit
                  _
                %s1129 = sdiv.u32.pop %s1016, 9
                %s1130 = srem.u32.pop %s1016, 9
                %s1131 = smul.u32 %s1129, 9
                %s1132 = smul.u32 8, %s1131
                %s1133 = scalar_lea.vmem %s1009, %s1132 [#allocation2]
                %s1134 = smul.u32 8, %s1131
                %s1135 = scalar_lea.vmem %s1020, %s1134
                // While loop
                $region70: #{tpu_custom_call.1} parent=61 // loop_pre_header
                  _
                $region71: #{tpu_custom_call.1} parent=61 // loop_header
                  %s1137 = sphi 0, %s1139
                  %p1138 = scmp.ge.s32.totalorder %s1137, %s1130
                  %s1142 = sphi 0, %s1149
                  %s1143 = sphi %s1133, %s1152
                  %s1144 = sphi %s1135, %s1153
                $region72: #{tpu_custom_call.1} parent=61 // loop_header_branch
                  %1141 = sbr.rel (%p1138) target = $region76
                $region73: #{tpu_custom_call.1} parent=61 // loop_body
                  %v1145 = vld [vmem:[%s1143] sm:$0xff]
                  %1146 = vst [vmem:[%s1144] sm:$0xff] %v1145
                  %s1147 = sadd.s32 1, %s1142
                  %p1148 = scmp.ge.s32.totalorder %s1147, %s1130
                  %s1149 = scalar_select %p1148, 0, %s1147
                  %s1150 = smul.u32 %s1149, 8
                  %s1151 = smul.u32 %s1149, 8
                  %s1152 = scalar_lea.vmem %s1133, %s1150 [#allocation2]
                  %s1153 = scalar_lea.vmem %s1135, %s1151
                $region74: #{tpu_custom_call.1} parent=61 // loop_footer
                  %s1139 = sadd.s32 %s1137, 1
                $region75: #{tpu_custom_call.1} parent=61 // loop_footer_branch
                  %1136 = sbr.rel target = $region71
                $region76: #{tpu_custom_call.1} parent=61 // loop_exit
                  _
              $region62: #{tpu_custom_call.1} parent=39 // pred_fallthru
                _
              // Predicated region
              $region77: #{tpu_custom_call.1} parent=39 // pred_check
                _
              $region78: #{tpu_custom_call.1} parent=39 // pred_check_branch
                %1155 = sbr.rel target = $region80
              $region79: #{tpu_custom_call.1} parent=39 // pred_region
                _
              $region80: #{tpu_custom_call.1} parent=39 // pred_fallthru
                _
            $region40: #{tpu_custom_call.1} parent=35 // pred_fallthru
              _
            // Predicated region
            $region41: #{tpu_custom_call.1} parent=35 // pred_check
              _
            $region42: #{tpu_custom_call.1} parent=35 // pred_check_branch
              %1027 = sbr.rel target = $region44
            $region43: #{tpu_custom_call.1} parent=35 // pred_region
              %s1029 = ssub.s32 256, 1
              %s1030 = sdiv.u32.pop %s1016, 9
              %s1031 = srem.u32.pop %s1016, 9
              // While loop
              $region45: #{tpu_custom_call.1} parent=43 // loop_pre_header
                _
              $region46: #{tpu_custom_call.1} parent=43 // loop_header
                %s1033 = sphi 0, %s1035
                %p1034 = scmp.ge.s32.totalorder %s1033, %s1030
                %s1038 = sphi 0, %s1061
                %s1039 = sphi %s1009, %s1064
                %s1040 = sphi %s1020, %s1065
              $region47: #{tpu_custom_call.1} parent=43 // loop_header_branch
                %1037 = sbr.rel (%p1034) target = $region51
              $region48: #{tpu_custom_call.1} parent=43 // loop_body
                %v1041 = vld [vmem:[%s1039] sm:%s1029]
                %1042 = vst [vmem:[%s1040] sm:%s1029] %v1041
                %v1043 = vld [vmem:[%s1039 + $0x8] sm:%s1029]
                %1044 = vst [vmem:[%s1040 + $0x8] sm:%s1029] %v1043
                %v1045 = vld [vmem:[%s1039 + $0x10] sm:%s1029]
                %1046 = vst [vmem:[%s1040 + $0x10] sm:%s1029] %v1045
                %v1047 = vld [vmem:[%s1039 + $0x18] sm:%s1029]
                %1048 = vst [vmem:[%s1040 + $0x18] sm:%s1029] %v1047
                %v1049 = vld [vmem:[%s1039 + $0x20] sm:%s1029]
                %1050 = vst [vmem:[%s1040 + $0x20] sm:%s1029] %v1049
                %v1051 = vld [vmem:[%s1039 + $0x28] sm:%s1029]
                %1052 = vst [vmem:[%s1040 + $0x28] sm:%s1029] %v1051
                %v1053 = vld [vmem:[%s1039 + $0x30] sm:%s1029]
                %1054 = vst [vmem:[%s1040 + $0x30] sm:%s1029] %v1053
                %v1055 = vld [vmem:[%s1039 + $0x38] sm:%s1029]
                %1056 = vst [vmem:[%s1040 + $0x38] sm:%s1029] %v1055
                %v1057 = vld [vmem:[%s1039 + $0x40] sm:%s1029]
                %1058 = vst [vmem:[%s1040 + $0x40] sm:%s1029] %v1057
                %s1059 = sadd.s32 1, %s1038
                %p1060 = scmp.ge.s32.totalorder %s1059, %s1030
                %s1061 = scalar_select %p1060, 0, %s1059
                %s1062 = smul.u32 %s1061, 72
                %s1063 = smul.u32 %s1061, 72
                %s1064 = scalar_lea.vmem %s1009, %s1062 [#allocation2]
                %s1065 = scalar_lea.vmem %s1020, %s1063
              $region49: #{tpu_custom_call.1} parent=43 // loop_footer
                %s1035 = sadd.s32 %s1033, 1
              $region50: #{tpu_custom_call.1} parent=43 // loop_footer_branch
                %1032 = sbr.rel target = $region46
              $region51: #{tpu_custom_call.1} parent=43 // loop_exit
                _
              %s1066 = sdiv.u32.pop %s1016, 9
              %s1067 = srem.u32.pop %s1016, 9
              %s1068 = smul.u32 %s1066, 9
              %s1069 = smul.u32 8, %s1068
              %s1070 = scalar_lea.vmem %s1009, %s1069 [#allocation2]
              %s1071 = smul.u32 8, %s1068
              %s1072 = scalar_lea.vmem %s1020, %s1071
              // While loop
              $region52: #{tpu_custom_call.1} parent=43 // loop_pre_header
                _
              $region53: #{tpu_custom_call.1} parent=43 // loop_header
                %s1074 = sphi 0, %s1076
                %p1075 = scmp.ge.s32.totalorder %s1074, %s1067
                %s1079 = sphi 0, %s1086
                %s1080 = sphi %s1070, %s1089
                %s1081 = sphi %s1072, %s1090
              $region54: #{tpu_custom_call.1} parent=43 // loop_header_branch
                %1078 = sbr.rel (%p1075) target = $region58
              $region55: #{tpu_custom_call.1} parent=43 // loop_body
                %v1082 = vld [vmem:[%s1080] sm:%s1029]
                %1083 = vst [vmem:[%s1081] sm:%s1029] %v1082
                %s1084 = sadd.s32 1, %s1079
                %p1085 = scmp.ge.s32.totalorder %s1084, %s1067
                %s1086 = scalar_select %p1085, 0, %s1084
                %s1087 = smul.u32 %s1086, 8
                %s1088 = smul.u32 %s1086, 8
                %s1089 = scalar_lea.vmem %s1070, %s1087 [#allocation2]
                %s1090 = scalar_lea.vmem %s1072, %s1088
              $region56: #{tpu_custom_call.1} parent=43 // loop_footer
                %s1076 = sadd.s32 %s1074, 1
              $region57: #{tpu_custom_call.1} parent=43 // loop_footer_branch
                %1073 = sbr.rel target = $region53
              $region58: #{tpu_custom_call.1} parent=43 // loop_exit
                _
            $region44: #{tpu_custom_call.1} parent=35 // pred_fallthru
              _
          $region36: #{tpu_custom_call.1} parent=31 // pred_fallthru
            _
          %1156 = vnop
        $region32: #{tpu_custom_call.1} parent=27 // pred_fallthru
          _
      $region28: #{tpu_custom_call.1} parent=5 // pred_fallthru
        _
      %p1157 = scmp.le.s32.totalorder 2, %s8
      // Predicated region
      $region81: #{tpu_custom_call.1} parent=5 // pred_check
        %p1158 = pneg %p1157
      $region82: #{tpu_custom_call.1} parent=5 // pred_check_branch
        %1160 = sbr.rel (%p1158) target = $region84
      $region83: #{tpu_custom_call.1} parent=5 // pred_region
        %s1161 = ssub.s32 %s8, 2
        // Predicated region
        $region85: #{tpu_custom_call.1} parent=83 // pred_check
          %p1162 = pneg %p89
        $region86: #{tpu_custom_call.1} parent=83 // pred_check_branch
          %1164 = sbr.rel (%p1162) target = $region88
        $region87: #{tpu_custom_call.1} parent=83 // pred_region
          %s1165 = sand.u32 %s74, 1
          %s1166 = sand.u32 %s74, 1
          %s1167 = smul.addr %s1166, 72
          %s1168 = scalar_lea.vmem [#allocation2], %s1167
        $region88: #{tpu_custom_call.1} parent=83 // pred_fallthru
          _
      $region84: #{tpu_custom_call.1} parent=5 // pred_fallthru
        _
    $region6: #{tpu_custom_call.1} parent=1 // loop_footer
      %s12 = sadd.s32 1, %s8
    $region7: #{tpu_custom_call.1} parent=1 // loop_footer_branch
      %7 = sbr.rel target = $region3
    $region8: #{tpu_custom_call.1} parent=1 // loop_exit
      _

</llo_original>
